<compile_context>
chip_gen: v7x
topology: tpu7x:2x2x1
jax: 0.10.0
libtpu: 0.0.40
codegen_flags: <defaults>
</compile_context>

<pallas_src>
import functools

import numpy as np
import jax
import jax.numpy as jnp
from jax.experimental import pallas as pl
from jax.experimental.pallas import tpu as pltpu


# ----------------------------------------------------------------------------
# Mask construction (reimplements masks.create_degrees / create_masks that the
# PyTorch module relies on — TFP-style autoregressive masks).
# ----------------------------------------------------------------------------
def create_degrees(input_size, hidden_units, input_order="left-to-right",
                   hidden_degrees="equal"):
    assert input_order == "left-to-right"
    assert hidden_degrees == "equal"
    degrees = [np.arange(1, input_size + 1)]
    for units in hidden_units:
        min_degree = min(int(np.min(degrees[-1])), input_size - 1)
        degrees.append(
            np.maximum(
                min_degree,
                np.ceil(np.arange(1, units + 1) * (input_size - 1)
                        / float(units + 1)).astype(np.int32),
            )
        )
    return degrees


def create_masks(degrees):
    masks = [
        (inp[:, np.newaxis] <= out).astype(np.float32)
        for inp, out in zip(degrees[:-1], degrees[1:])
    ]
    masks.append((degrees[-1][:, np.newaxis] < degrees[0]).astype(np.float32))
    return masks


# ----------------------------------------------------------------------------
# Pallas kernel: whole MADE forward (layer0 [masked + context + bias fused into
# one matmul] -> ReLU -> masked linear -> ReLU -> masked linear) fused.
# Weights arrive pre-masked, pre-transposed (in, out) and lane-padded.
# ----------------------------------------------------------------------------
def made_kernel(xc_ref, w01_ref, w1_ref, b1_ref, w2_ref, b2_ref, out_ref):
    # layer 0: [x, ctx, 1] @ [[m0*w0].T ; wc.T ; b0]  (bias & context folded in)
    h0 = jnp.dot(xc_ref[...], w01_ref[...], preferred_element_type=jnp.float32)

    # ReLU -> masked hidden->hidden
    h1 = jnp.dot(jnp.maximum(h0, 0.0), w1_ref[...],
                 preferred_element_type=jnp.float32) + b1_ref[...]

    # ReLU -> masked hidden->output (output dim lane-padded to mult of 128)
    out = jnp.dot(jnp.maximum(h1, 0.0), w2_ref[...],
                  preferred_element_type=jnp.float32) + b2_ref[...]

    out_ref[...] = out.astype(out_ref.dtype)


def _pick_block_b(B):
    """Batch block: whole batch if small, else a large divisor (multiple of 8)."""
    if B <= 512:
        return B
    for cand in (512, 256, 128, 64, 32, 16, 8):
        if B % cand == 0:
            return cand
    return B


def made_forward(x, context, folded, num_output):
    """x: (B, num_input) f32, context: (B, num_context) f32.
    folded: (w01, w1m, b1, w2m_pad, b2_pad) pre-masked / pre-transposed weights.
    """
    w01, w1m, b1, w2m, b2p = folded
    B = x.shape[0]
    K0 = x.shape[1] + context.shape[1] + 1        # +1 for folded layer-0 bias
    H = w1m.shape[0]
    O_pad = w2m.shape[1]

    # Fold layer-0 bias via a ones column; merge context into the same matmul.
    ones = jnp.ones((B, 1), x.dtype)
    xc = jnp.concatenate([x, context, ones], axis=-1)

    block_b = _pick_block_b(B)
    grid = (pl.cdiv(B, block_b),)

    out_padded = pl.pallas_call(
        made_kernel,
        out_shape=jax.ShapeDtypeStruct((B, O_pad), jnp.float32),
        grid_spec=pltpu.PrefetchScalarGridSpec(
            num_scalar_prefetch=0,
            grid=grid,
            in_specs=[
                pl.BlockSpec((block_b, K0), lambda i: (i, 0)),   # activations
                pl.BlockSpec((K0, H),       lambda i: (0, 0)),   # fused layer-0 W
                pl.BlockSpec((H, H),        lambda i: (0, 0)),   # masked W1
                pl.BlockSpec((1, H),        lambda i: (0, 0)),   # b1
                pl.BlockSpec((H, O_pad),    lambda i: (0, 0)),   # masked W2 (padded)
                pl.BlockSpec((1, O_pad),    lambda i: (0, 0)),   # b2 (padded)
            ],
            out_specs=pl.BlockSpec((block_b, O_pad), lambda i: (i, 0)),
        ),
        compiler_params=pltpu.CompilerParams(
            dimension_semantics=("parallel",),       # megacore sharding on v7x
            vmem_limit_bytes=32 * 1024 * 1024,
        ),
    )(xc, w01, w1m, b1, w2m, b2p)

    # Drop lane padding.
    return out_padded[:, :num_output]


# ----------------------------------------------------------------------------
# Parameter setup (mimics nn.Linear default init shapes) + host-side folding.
# ----------------------------------------------------------------------------
def init_made(key, num_input, num_outputs_per_input, num_hidden, num_context):
    degrees = create_degrees(num_input, [num_hidden] * 2)
    masks_np = create_masks(degrees)
    # replicate last mask per output-per-input, then transpose (as in torch code)
    masks_np[-1] = np.hstack([masks_np[-1] for _ in range(num_outputs_per_input)])
    masks_t = [jnp.asarray(m.T, dtype=jnp.float32) for m in masks_np]

    def linear_init(k, out_f, in_f, bias=True):
        k1, k2 = jax.random.split(k)
        bound = 1.0 / np.sqrt(in_f)
        w = jax.random.uniform(k1, (out_f, in_f), jnp.float32, -bound, bound)
        b = (jax.random.uniform(k2, (1, out_f), jnp.float32, -bound, bound)
             if bias else None)
        return w, b

    k0, kc, k1, k2 = jax.random.split(key, 4)
    num_output = num_outputs_per_input * num_input
    w0, b0 = linear_init(k0, num_hidden, num_input)
    wc, _ = linear_init(kc, num_hidden, num_context, bias=False)
    w1, b1 = linear_init(k1, num_hidden, num_hidden)
    w2, b2 = linear_init(k2, num_output, num_hidden)
    params = (w0, b0, wc, w1, b1, w2, b2)
    return params, masks_t


def fold_params(params, masks, lane_pad=128, dtype=jnp.float32):
    """Fold masks into weights, pre-transpose to (in, out), merge context weight
    and layer-0 bias, and lane-pad the output dim. Do this once per weight
    update (it is static w.r.t. the forward pass)."""
    w0, b0, wc, w1, b1, w2, b2 = params
    m0, m1, m2 = masks

    # layer 0: [(m0*w0).T ; wc.T ; b0]  -> (num_input + num_context + 1, H)
    w01 = jnp.concatenate([(m0 * w0).T, wc.T, b0], axis=0).astype(dtype)
    w1m = ((m1 * w1).T).astype(dtype)                       # (H, H)
    w2m = (m2 * w2).T                                       # (H, O)

    O = w2m.shape[1]
    O_pad = ((O + lane_pad - 1) // lane_pad) * lane_pad
    pad = O_pad - O
    if pad:
        w2m = jnp.pad(w2m, ((0, 0), (0, pad)))
        b2p = jnp.pad(b2, ((0, 0), (0, pad)))
    else:
        b2p = b2
    return (w01, w1m, b1.astype(dtype), w2m.astype(dtype), b2p.astype(dtype)), O


def made_reference(x, context, params, masks):
    """Pure-JAX reference matching the PyTorch forward semantics exactly."""
    w0, b0, wc, w1, b1, w2, b2 = params
    m0, m1, m2 = masks
    h0 = x @ (m0 * w0).T + b0 + context @ wc.T
    h1 = jnp.maximum(h0, 0.0) @ (m1 * w1).T + b1
    return jnp.maximum(h1, 0.0) @ (m2 * w2).T + b2


if __name__ == "__main__":
    num_input = 8
    num_outputs_per_input = 2
    num_hidden = 32
    num_context = 4
    batch = 8

    key = jax.random.PRNGKey(0)
    kp, kx, kc = jax.random.split(key, 3)

    params, masks_t = init_made(kp, num_input, num_outputs_per_input,
                                num_hidden, num_context)
    folded, num_output = fold_params(params, masks_t)

    x = jax.random.normal(kx, (batch, num_input), jnp.float32)
    context = jax.random.normal(kc, (batch, num_context), jnp.float32)

    forward = jax.jit(made_forward, static_argnums=(3,))
    out = forward(x, context, folded, num_output)
    out = jax.block_until_ready(out)

    ref = made_reference(x, context, params, masks_t)
    np.testing.assert_allclose(np.asarray(out), np.asarray(ref),
                               rtol=1e-5, atol=1e-4)

    print("KERNEL_OK")
</pallas_src>

<mosaic_0001>
module attributes {stable_mosaic.version = 11 : i64} {
  func.func @made_kernel(%arg0: i32, %arg1: memref<8x13xf32, #tpu.memory_space<vmem>>, %arg2: memref<13x32xf32, #tpu.memory_space<vmem>>, %arg3: memref<32x32xf32, #tpu.memory_space<vmem>>, %arg4: memref<1x32xf32, #tpu.memory_space<vmem>>, %arg5: memref<32x128xf32, #tpu.memory_space<vmem>>, %arg6: memref<1x128xf32, #tpu.memory_space<vmem>>, %arg7: memref<8x128xf32, #tpu.memory_space<vmem>>) attributes {dimension_semantics = [#tpu.dimension_semantics<parallel>], iteration_bounds = array<i64: 1>, scalar_prefetch = 0 : i64, scratch_operands = 0 : i64, tpu.core_type = #tpu.core_type<tc>, window_params = [{transform_indices = @transform_0, window_bounds = array<i64: 8, 13>}, {pipeline_mode = #tpu.pipeline_mode<synchronous>, transform_indices = @transform_1, window_bounds = array<i64: 13, 32>}, {pipeline_mode = #tpu.pipeline_mode<synchronous>, transform_indices = @transform_2, window_bounds = array<i64: 32, 32>}, {pipeline_mode = #tpu.pipeline_mode<synchronous>, transform_indices = @transform_3, window_bounds = array<i64: 1, 32>}, {pipeline_mode = #tpu.pipeline_mode<synchronous>, transform_indices = @transform_4, window_bounds = array<i64: 32, 128>}, {pipeline_mode = #tpu.pipeline_mode<synchronous>, transform_indices = @transform_5, window_bounds = array<i64: 1, 128>}, {transform_indices = @transform_6, window_bounds = array<i64: 8, 128>}]} {
    %c0 = arith.constant 0 : index
    %c0_0 = arith.constant 0 : index
    %0 = vector.load %arg1[%c0, %c0_0] : memref<8x13xf32, #tpu.memory_space<vmem>>, vector<8x13xf32>
    %c0_1 = arith.constant 0 : index
    %c0_2 = arith.constant 0 : index
    %1 = vector.load %arg2[%c0_1, %c0_2] : memref<13x32xf32, #tpu.memory_space<vmem>>, vector<13x32xf32>
    %cst = arith.constant dense<0.000000e+00> : vector<8x32xf32>
    %2 = tpu.matmul %0, %1, %cst {dimension_numbers = #tpu.dot_dimension_numbers<[1], [0], [0], [1], [0, 0, 1, 1], [], []>} : vector<8x13xf32>, vector<13x32xf32>, vector<8x32xf32> -> vector<8x32xf32>
    %cst_3 = arith.constant 0.000000e+00 : f32
    %3 = vector.broadcast %cst_3 : f32 to vector<8x32xf32>
    %4 = arith.maximumf %2, %3 : vector<8x32xf32>
    %c0_4 = arith.constant 0 : index
    %c0_5 = arith.constant 0 : index
    %5 = vector.load %arg3[%c0_4, %c0_5] : memref<32x32xf32, #tpu.memory_space<vmem>>, vector<32x32xf32>
    %cst_6 = arith.constant dense<0.000000e+00> : vector<8x32xf32>
    %6 = tpu.matmul %4, %5, %cst_6 {dimension_numbers = #tpu.dot_dimension_numbers<[1], [0], [0], [1], [0, 0, 1, 1], [], []>} : vector<8x32xf32>, vector<32x32xf32>, vector<8x32xf32> -> vector<8x32xf32>
    %c0_7 = arith.constant 0 : index
    %c0_8 = arith.constant 0 : index
    %7 = vector.load %arg4[%c0_7, %c0_8] : memref<1x32xf32, #tpu.memory_space<vmem>>, vector<1x32xf32>
    %8 = vector.broadcast %7 : vector<1x32xf32> to vector<8x32xf32>
    %9 = arith.addf %6, %8 : vector<8x32xf32>
    %cst_9 = arith.constant 0.000000e+00 : f32
    %10 = vector.broadcast %cst_9 : f32 to vector<8x32xf32>
    %11 = arith.maximumf %9, %10 : vector<8x32xf32>
    %c0_10 = arith.constant 0 : index
    %c0_11 = arith.constant 0 : index
    %12 = vector.load %arg5[%c0_10, %c0_11] : memref<32x128xf32, #tpu.memory_space<vmem>>, vector<32x128xf32>
    %cst_12 = arith.constant dense<0.000000e+00> : vector<8x128xf32>
    %13 = tpu.matmul %11, %12, %cst_12 {dimension_numbers = #tpu.dot_dimension_numbers<[1], [0], [0], [1], [0, 0, 1, 1], [], []>} : vector<8x32xf32>, vector<32x128xf32>, vector<8x128xf32> -> vector<8x128xf32>
    %c0_13 = arith.constant 0 : index
    %c0_14 = arith.constant 0 : index
    %14 = vector.load %arg6[%c0_13, %c0_14] : memref<1x128xf32, #tpu.memory_space<vmem>>, vector<1x128xf32>
    %15 = vector.broadcast %14 : vector<1x128xf32> to vector<8x128xf32>
    %16 = arith.addf %13, %15 : vector<8x128xf32>
    %c0_15 = arith.constant 0 : index
    %c0_16 = arith.constant 0 : index
    %17 = vector.load %arg7[%c0_15, %c0_16] : memref<8x128xf32, #tpu.memory_space<vmem>>, vector<8x128xf32>
    tpu.vector_store %arg7[%c0_15, %c0_16], %16 {strides = array<i32>} : memref<8x128xf32, #tpu.memory_space<vmem>>, vector<8x128xf32>,
    return
  }
  func.func @transform_0(%arg0: i32) -> (i32, i32) {
    %c0_i32 = arith.constant 0 : i32
    %c0_i32_0 = arith.constant 0 : i32
    return %arg0, %c0_i32 : i32, i32
  }
  func.func @transform_1(%arg0: i32) -> (i32, i32) {
    %c0_i32 = arith.constant 0 : i32
    %c0_i32_0 = arith.constant 0 : i32
    %c0_i32_1 = arith.constant 0 : i32
    return %c0_i32, %c0_i32_0 : i32, i32
  }
  func.func @transform_2(%arg0: i32) -> (i32, i32) {
    %c0_i32 = arith.constant 0 : i32
    %c0_i32_0 = arith.constant 0 : i32
    %c0_i32_1 = arith.constant 0 : i32
    return %c0_i32, %c0_i32_0 : i32, i32
  }
  func.func @transform_3(%arg0: i32) -> (i32, i32) {
    %c0_i32 = arith.constant 0 : i32
    %c0_i32_0 = arith.constant 0 : i32
    %c0_i32_1 = arith.constant 0 : i32
    return %c0_i32, %c0_i32_0 : i32, i32
  }
  func.func @transform_4(%arg0: i32) -> (i32, i32) {
    %c0_i32 = arith.constant 0 : i32
    %c0_i32_0 = arith.constant 0 : i32
    %c0_i32_1 = arith.constant 0 : i32
    return %c0_i32, %c0_i32_0 : i32, i32
  }
  func.func @transform_5(%arg0: i32) -> (i32, i32) {
    %c0_i32 = arith.constant 0 : i32
    %c0_i32_0 = arith.constant 0 : i32
    %c0_i32_1 = arith.constant 0 : i32
    return %c0_i32, %c0_i32_0 : i32, i32
  }
  func.func @transform_6(%arg0: i32) -> (i32, i32) {
    %c0_i32 = arith.constant 0 : i32
    %c0_i32_0 = arith.constant 0 : i32
    return %arg0, %c0_i32 : i32, i32
  }
}

</mosaic_0001>

<llo_original>
// kernel: made_forward.1
$region0: #{made_forward.1}
  #allocation0 [shape = 'u32[]', space=smem, size = 0x4, offset = 0x4, fixed_abs, tag = 'smem constant byte address 0x4 - core index']
  #allocation1 [shape = 'u32[144,128]{1,0:T(1,128)}', space=vmem, size = 0x12000, scoped, tag = 'internal scratch']
  %s0 = inlined_call_operand.vmem [shape: f32[8,13], index: 0, kind: input, shape index: {}]
  %s1 = inlined_call_operand.vmem [shape: f32[13,32], index: 1, kind: input, shape index: {}]
  %s2 = inlined_call_operand.vmem [shape: f32[32,32], index: 2, kind: input, shape index: {}]
  %s3 = inlined_call_operand.vmem [shape: f32[1,32], index: 3, kind: input, shape index: {}]
  %s4 = inlined_call_operand.hbm [shape: f32[32,128], index: 4, kind: input, shape index: {}]
  %s5 = inlined_call_operand.vmem [shape: f32[1,128], index: 5, kind: input, shape index: {}]
  %s6 = inlined_call_operand.hbm [shape: f32[8,128], index: 6, kind: output, shape index: {}]
  %s7 = sld [smem:[#allocation0]]
  $region38: #{made_forward.1} parent=0
    _
  %s9 = ssub.s32 1, %s7
  %s10 = scalar_select 0, %s9, %s7
  $region1: #{made_forward.1} parent=0
    #allocation2 [shape = 'u8[16384]{0}', space=vmem, size = 0x4000, scoped, tag = 'input window, operand 4, single buffered']
    #allocation3 [shape = 's32[1]{0}', space=sflag, size = 0x4, scoped, tag = 'scoped memory for made_forward.1']
    #allocation4 [shape = 's32[1]{0}', space=sflag, size = 0x4, scoped, tag = 'scoped memory for made_forward.1']
    #allocation5 [shape = 'u8[4096]{0}', space=vmem, size = 0x1000, scoped, tag = 'output window, operand 0, single buffered']
    %11 = vsyncpa [#allocation3], 0
    %12 = vsyncpa [#allocation4], 0
    // Predicated region
    $region2: #{made_forward.1} parent=1 // pred_check
      _
    $region3: #{made_forward.1} parent=1 // pred_check_branch
      %14 = sbr.rel (0) target = $region5
    $region4: #{made_forward.1} parent=1 // pred_region
      _
    $region5: #{made_forward.1} parent=1 // pred_fallthru
      _
    // Predicated region
    $region6: #{made_forward.1} parent=1 // pred_check
      _
    $region7: #{made_forward.1} parent=1 // pred_check_branch
      %16 = sbr.rel (0) target = $region9
    $region8: #{made_forward.1} parent=1 // pred_region
      _
    $region9: #{made_forward.1} parent=1 // pred_fallthru
      _
    // Predicated region
    $region10: #{made_forward.1} parent=1 // pred_check
      _
    $region11: #{made_forward.1} parent=1 // pred_check_branch
      %18 = sbr.rel (0) target = $region13
    $region12: #{made_forward.1} parent=1 // pred_region
      _
    $region13: #{made_forward.1} parent=1 // pred_fallthru
      _
    // Predicated region
    $region14: #{made_forward.1} parent=1 // pred_check
      _
    $region15: #{made_forward.1} parent=1 // pred_check_branch
      %20 = sbr.rel (0) target = $region17
    $region16: #{made_forward.1} parent=1 // pred_region
      _
    $region17: #{made_forward.1} parent=1 // pred_fallthru
      _
    // Predicated region
    $region18: #{made_forward.1} parent=1 // pred_check
      _
    $region19: #{made_forward.1} parent=1 // pred_check_branch
      %22 = sbr.rel (0) target = $region21
    $region20: #{made_forward.1} parent=1 // pred_region
      %s24 = ssub.s32 512, 512
      %25 = vsyncadd [#allocation3], %s24
      %s26 = sshll.u32 [#allocation2], 4
      %s27 = int_to_ptr.vmem [resolvable:$true] %s26
      %32 = dma.hbm_to_vmem [thread:$0]  %s4, 512, %s27, [#allocation3], 128, 128, 8
    $region21: #{made_forward.1} parent=1 // pred_fallthru
      _
    // Predicated region
    $region22: #{made_forward.1} parent=1 // pred_check
      _
    $region23: #{made_forward.1} parent=1 // pred_check_branch
      %34 = sbr.rel (0) target = $region25
    $region24: #{made_forward.1} parent=1 // pred_region
      _
    $region25: #{made_forward.1} parent=1 // pred_fallthru
      _
    // Predicated region
    $region26: #{made_forward.1} parent=1 // pred_check
      _
    $region27: #{made_forward.1} parent=1 // pred_check_branch
      %36 = sbr.rel (0) target = $region29
    $region28: #{made_forward.1} parent=1 // pred_region
      %37 = dma.done [#allocation3], 512
    $region29: #{made_forward.1} parent=1 // pred_fallthru
      _
    %v38 = vld [vmem:[%s0] sm:$0xff]
    %v39 = vld [vmem:[%s1] sm:$0xff]
    %v40 = vld [vmem:[%s1 + $0x8] sm:$0x1f]
    %vm41 = vcmask 105472
    %v43 = vsel %vm41, %v38, 0
    %vm45 = vcmask 1044480
    %v47 = vsel %vm45, %v40, 0
    %49 = vmatprep.subr.mxu0 0.0
    %50 = vmatpush1.msra.mxu0 %v39
    %51 = vmatprep.subr.mxu0 0.0
    %52 = vmatpush1.msra.mxu0 %v47
    %53 = vmatprep.subr.mxu0 0.0
    %54 = vmatpush1.msra.mxu0 0.0
    %55 = vmatprep.subr.mxu0 0.0
    %56 = vmatpush1.msra.mxu0 0.0
    %57 = vmatprep.subr.mxu0 0.0
    %58 = vmatpush1.msra.mxu0 0.0
    %59 = vmatprep.subr.mxu0 0.0
    %60 = vmatpush1.msra.mxu0 0.0
    %61 = vmatprep.subr.mxu0 0.0
    %62 = vmatpush1.msra.mxu0 0.0
    %63 = vmatprep.subr.mxu0 0.0
    %64 = vmatpush1.msra.mxu0 0.0
    %65 = vmatprep.subr.mxu0 0.0
    %66 = vmatpush1.msra.mxu0 0.0
    %67 = vmatprep.subr.mxu0 0.0
    %68 = vmatpush1.msra.mxu0 0.0
    %69 = vmatprep.subr.mxu0 0.0
    %70 = vmatpush1.msra.mxu0 0.0
    %71 = vmatprep.subr.mxu0 0.0
    %72 = vmatpush1.msra.mxu0 0.0
    %73 = vmatprep.subr.mxu0 0.0
    %74 = vmatpush1.msra.mxu0 0.0
    %75 = vmatprep.subr.mxu0 0.0
    %76 = vmatpush1.msra.mxu0 0.0
    %77 = vmatprep.subr.mxu0 0.0
    %78 = vmatpush1.msra.mxu0 0.0
    %79 = vmatprep.subr.mxu0 0.0
    %80 = vmatpush1.msra.mxu0 0.0
    %81 = vmatprep.subr.mxu0 0.0
    %82 = vmatpush1.msra.mxu0 0.0
    %83 = vmatprep.subr.mxu0 0.0
    %84 = vmatpush1.msra.mxu0 0.0
    %85 = vmatprep.subr.mxu0 0.0
    %86 = vmatpush1.msra.mxu0 0.0
    %87 = vmatprep.subr.mxu0 0.0
    %88 = vmatpush1.msra.mxu0 0.0
    %89 = vmatprep.subr.mxu0 0.0
    %90 = vmatpush1.msra.mxu0 0.0
    %91 = vmatprep.subr.mxu0 0.0
    %92 = vmatpush1.msra.mxu0 0.0
    %93 = vmatprep.subr.mxu0 0.0
    %94 = vmatpush1.msra.mxu0 0.0
    %95 = vmatprep.subr.mxu0 0.0
    %96 = vmatpush1.msra.mxu0 0.0
    %97 = vmatprep.subr.mxu0 0.0
    %98 = vmatpush1.msra.mxu0 0.0
    %99 = vmatprep.subr.mxu0 0.0
    %100 = vmatpush1.msra.mxu0 0.0
    %101 = vmatprep.subr.mxu0 0.0
    %102 = vmatpush1.msra.mxu0 0.0
    %103 = vmatprep.subr.mxu0 0.0
    %104 = vmatpush1.msra.mxu0 0.0
    %105 = vmatprep.subr.mxu0 0.0
    %106 = vmatpush1.msra.mxu0 0.0
    %107 = vmatprep.subr.mxu0 0.0
    %108 = vmatpush1.msra.mxu0 0.0
    %109 = vmatprep.subr.mxu0 0.0
    %110 = vmatpush1.msra.mxu0 0.0
    %111 = vmatprep.subr.mxu0 0.0
    %112 = vmatpush1.msra.mxu0 0.0
    %113 = vmatprep.mubr.f32.mxu0 0.0
    %114 = vmatmul.mubr.f32.gmra.mrb[0].mxu0 %v43
    %v115 = vpop.f32.mrb[0].mxu0
    %v116 = vadd.f32 0.0, %v115
    %v117 = vpop.f32.mrb[0].mxu0
    %118 = vdwg.mxu0
    %v119 = vmax.f32 %v116, 0.0
    %v120 = vld [vmem:[%s2] sm:$0xff]
    %v121 = vld [vmem:[%s2 + $0x8] sm:$0xff]
    %v122 = vld [vmem:[%s2 + $0x10] sm:$0xff]
    %v123 = vld [vmem:[%s2 + $0x18] sm:$0xff]
    %v124 = vld [vmem:[%s3] sm:$0x1]
    %v126 = vlaneseq
    %v127 = vshrl.u32 %v126, 7
    %v128 = vsub.s32 0, %v127
    %v129 = vrot.slane %v124, %v128
    %vm131 = vcmask 261120
    %v133 = vsel %vm131, %v119, 0
    %135 = vmatprep.subr.mxu0 0.0
    %136 = vmatpush1.msra.mxu0 %v120
    %137 = vmatprep.subr.mxu0 0.0
    %138 = vmatpush1.msra.mxu0 %v121
    %139 = vmatprep.subr.mxu0 0.0
    %140 = vmatpush1.msra.mxu0 %v122
    %141 = vmatprep.subr.mxu0 0.0
    %142 = vmatpush1.msra.mxu0 %v123
    %143 = vmatprep.subr.mxu0 0.0
    %144 = vmatpush1.msra.mxu0 0.0
    %145 = vmatprep.subr.mxu0 0.0
    %146 = vmatpush1.msra.mxu0 0.0
    %147 = vmatprep.subr.mxu0 0.0
    %148 = vmatpush1.msra.mxu0 0.0
    %149 = vmatprep.subr.mxu0 0.0
    %150 = vmatpush1.msra.mxu0 0.0
    %151 = vmatprep.subr.mxu0 0.0
    %152 = vmatpush1.msra.mxu0 0.0
    %153 = vmatprep.subr.mxu0 0.0
    %154 = vmatpush1.msra.mxu0 0.0
    %155 = vmatprep.subr.mxu0 0.0
    %156 = vmatpush1.msra.mxu0 0.0
    %157 = vmatprep.subr.mxu0 0.0
    %158 = vmatpush1.msra.mxu0 0.0
    %159 = vmatprep.subr.mxu0 0.0
    %160 = vmatpush1.msra.mxu0 0.0
    %161 = vmatprep.subr.mxu0 0.0
    %162 = vmatpush1.msra.mxu0 0.0
    %163 = vmatprep.subr.mxu0 0.0
    %164 = vmatpush1.msra.mxu0 0.0
    %165 = vmatprep.subr.mxu0 0.0
    %166 = vmatpush1.msra.mxu0 0.0
    %167 = vmatprep.subr.mxu0 0.0
    %168 = vmatpush1.msra.mxu0 0.0
    %169 = vmatprep.subr.mxu0 0.0
    %170 = vmatpush1.msra.mxu0 0.0
    %171 = vmatprep.subr.mxu0 0.0
    %172 = vmatpush1.msra.mxu0 0.0
    %173 = vmatprep.subr.mxu0 0.0
    %174 = vmatpush1.msra.mxu0 0.0
    %175 = vmatprep.subr.mxu0 0.0
    %176 = vmatpush1.msra.mxu0 0.0
    %177 = vmatprep.subr.mxu0 0.0
    %178 = vmatpush1.msra.mxu0 0.0
    %179 = vmatprep.subr.mxu0 0.0
    %180 = vmatpush1.msra.mxu0 0.0
    %181 = vmatprep.subr.mxu0 0.0
    %182 = vmatpush1.msra.mxu0 0.0
    %183 = vmatprep.subr.mxu0 0.0
    %184 = vmatpush1.msra.mxu0 0.0
    %185 = vmatprep.subr.mxu0 0.0
    %186 = vmatpush1.msra.mxu0 0.0
    %187 = vmatprep.subr.mxu0 0.0
    %188 = vmatpush1.msra.mxu0 0.0
    %189 = vmatprep.subr.mxu0 0.0
    %190 = vmatpush1.msra.mxu0 0.0
    %191 = vmatprep.subr.mxu0 0.0
    %192 = vmatpush1.msra.mxu0 0.0
    %193 = vmatprep.subr.mxu0 0.0
    %194 = vmatpush1.msra.mxu0 0.0
    %195 = vmatprep.subr.mxu0 0.0
    %196 = vmatpush1.msra.mxu0 0.0
    %197 = vmatprep.subr.mxu0 0.0
    %198 = vmatpush1.msra.mxu0 0.0
    %199 = vmatprep.mubr.f32.mxu0 0.0
    %200 = vmatmul.mubr.f32.gmra.mrb[0].mxu0 %v133
    %v201 = vpop.f32.mrb[0].mxu0
    %v202 = vadd.f32 %v129, %v201
    %v203 = vpop.f32.mrb[0].mxu0
    %204 = vdwg.mxu0
    %v205 = vmax.f32 %v202, 0.0
    %v206 = vld [vmem:[#allocation2] sm:$0xff]
    %v207 = vld [vmem:[#allocation2 + $0x8] sm:$0xff]
    %v208 = vld [vmem:[#allocation2 + $0x10] sm:$0xff]
    %v209 = vld [vmem:[#allocation2 + $0x18] sm:$0xff]
    %v210 = vld [vmem:[%s5] sm:$0x1]
    %v212 = vlaneseq
    %v213 = vshrl.u32 %v212, 7
    %v214 = vsub.s32 0, %v213
    %v215 = vrot.slane %v210, %v214
    %v218 = vsel %vm131, %v205, 0
    %220 = vmatprep.subr.mxu0 0.0
    %221 = vmatpush1.msra.mxu0 %v206
    %222 = vmatprep.subr.mxu0 0.0
    %223 = vmatpush1.msra.mxu0 %v207
    %224 = vmatprep.subr.mxu0 0.0
    %225 = vmatpush1.msra.mxu0 %v208
    %226 = vmatprep.subr.mxu0 0.0
    %227 = vmatpush1.msra.mxu0 %v209
    %228 = vmatprep.subr.mxu0 0.0
    %229 = vmatpush1.msra.mxu0 0.0
    %230 = vmatprep.subr.mxu0 0.0
    %231 = vmatpush1.msra.mxu0 0.0
    %232 = vmatprep.subr.mxu0 0.0
    %233 = vmatpush1.msra.mxu0 0.0
    %234 = vmatprep.subr.mxu0 0.0
    %235 = vmatpush1.msra.mxu0 0.0
    %236 = vmatprep.subr.mxu0 0.0
    %237 = vmatpush1.msra.mxu0 0.0
    %238 = vmatprep.subr.mxu0 0.0
    %239 = vmatpush1.msra.mxu0 0.0
    %240 = vmatprep.subr.mxu0 0.0
    %241 = vmatpush1.msra.mxu0 0.0
    %242 = vmatprep.subr.mxu0 0.0
    %243 = vmatpush1.msra.mxu0 0.0
    %244 = vmatprep.subr.mxu0 0.0
    %245 = vmatpush1.msra.mxu0 0.0
    %246 = vmatprep.subr.mxu0 0.0
    %247 = vmatpush1.msra.mxu0 0.0
    %248 = vmatprep.subr.mxu0 0.0
    %249 = vmatpush1.msra.mxu0 0.0
    %250 = vmatprep.subr.mxu0 0.0
    %251 = vmatpush1.msra.mxu0 0.0
    %252 = vmatprep.subr.mxu0 0.0
    %253 = vmatpush1.msra.mxu0 0.0
    %254 = vmatprep.subr.mxu0 0.0
    %255 = vmatpush1.msra.mxu0 0.0
    %256 = vmatprep.subr.mxu0 0.0
    %257 = vmatpush1.msra.mxu0 0.0
    %258 = vmatprep.subr.mxu0 0.0
    %259 = vmatpush1.msra.mxu0 0.0
    %260 = vmatprep.subr.mxu0 0.0
    %261 = vmatpush1.msra.mxu0 0.0
    %262 = vmatprep.subr.mxu0 0.0
    %263 = vmatpush1.msra.mxu0 0.0
    %264 = vmatprep.subr.mxu0 0.0
    %265 = vmatpush1.msra.mxu0 0.0
    %266 = vmatprep.subr.mxu0 0.0
    %267 = vmatpush1.msra.mxu0 0.0
    %268 = vmatprep.subr.mxu0 0.0
    %269 = vmatpush1.msra.mxu0 0.0
    %270 = vmatprep.subr.mxu0 0.0
    %271 = vmatpush1.msra.mxu0 0.0
    %272 = vmatprep.subr.mxu0 0.0
    %273 = vmatpush1.msra.mxu0 0.0
    %274 = vmatprep.subr.mxu0 0.0
    %275 = vmatpush1.msra.mxu0 0.0
    %276 = vmatprep.subr.mxu0 0.0
    %277 = vmatpush1.msra.mxu0 0.0
    %278 = vmatprep.subr.mxu0 0.0
    %279 = vmatpush1.msra.mxu0 0.0
    %280 = vmatprep.subr.mxu0 0.0
    %281 = vmatpush1.msra.mxu0 0.0
    %282 = vmatprep.subr.mxu0 0.0
    %283 = vmatpush1.msra.mxu0 0.0
    %284 = vmatprep.mubr.f32.mxu0 0.0
    %285 = vmatmul.mubr.f32.gmra.mrb[0].mxu0 %v218
    %v286 = vpop.f32.mrb[0].mxu0
    %v287 = vadd.f32 %v215, %v286
    %v288 = vpop.f32.mrb[0].mxu0
    %289 = vdwg.mxu0
    %290 = vst [vmem:[#allocation5] sm:$0xff] %v287
    // Predicated region
    $region30: #{made_forward.1} parent=1 // pred_check
      _
    $region31: #{made_forward.1} parent=1 // pred_check_branch
      %292 = sbr.rel (0) target = $region33
    $region32: #{made_forward.1} parent=1 // pred_region
      %s294 = ssub.s32 128, 128
      %295 = vsyncadd [#allocation4], %s294
      %s297 = sshll.u32 [#allocation5], 4
      %s298 = int_to_ptr.vmem [resolvable:$true] %s297
      %300 = dma.vmem_to_hbm [thread:$0]  %s298, 128, %s6, [#allocation4]
    $region33: #{made_forward.1} parent=1 // pred_fallthru
      _
    // Predicated region
    $region34: #{made_forward.1} parent=1 // pred_check
      _
    $region35: #{made_forward.1} parent=1 // pred_check_branch
      %302 = sbr.rel (0) target = $region37
    $region36: #{made_forward.1} parent=1 // pred_region
      %303 = dma.done [#allocation4], 128
    $region37: #{made_forward.1} parent=1 // pred_fallthru
      _
    %304 = vsyncpa [#allocation3], 1
    %305 = vsyncpa [#allocation4], 1

</llo_original>
